<compile_context>
chip_gen: v7x
topology: tpu7x:2x2x1
jax: 0.10.0
libtpu: 0.0.40
codegen_flags: <defaults>
</compile_context>

<pallas_src>
import jax
import jax.numpy as jnp
import numpy as np
from jax import lax
from jax.experimental import pallas as pl
from jax.experimental.pallas import tpu as pltpu


# ---------------------------------------------------------------------------
# Pallas kernel: two lane-dense matmuls + ReLU per batch sample in the block.
# ---------------------------------------------------------------------------
def dib_kernel(slab_ref, wcatT_ref, bcat_ref, w11_ref, b11_ref, out_ref):
    nb = slab_ref.shape[0]

    # Hoist the (tiny, constant) weight/bias loads out of the per-sample loop.
    wcatT = wcatT_ref[...]        # [3*Cout, K]    bf16 (block-diagonal)
    bcat = bcat_ref[...]          # [3*Cout, 1]    f32  (folded BN bias)
    w11 = w11_ref[...]            # [Cout, 3*Cout] bf16
    b11 = b11_ref[...]            # [Cout, 1]      f32

    # nb is tiny (<= a few); a static unrolled loop is fine here.
    for n in range(nb):
        # All three dilated 3x3 convs (+ folded BN) as ONE block-diagonal
        # matmul with lane-dense output [3*Cout, HW]; bias in the epilogue,
        # then ReLU.  Rows are ordered [branch d=1 | d=2 | d=4], matching the
        # 1x1 conv's input-channel order (torch.cat order).
        cat = jnp.maximum(
            jnp.dot(wcatT, slab_ref[n], preferred_element_type=jnp.float32)
            + bcat,
            0.0)                                        # [3*Cout, HW] f32

        # 1x1 conv: plain dot, lane-dense [Cout, HW] output, NCHW-ordered.
        out_ref[n] = (
            jnp.dot(w11, cat.astype(w11.dtype),
                    preferred_element_type=jnp.float32) + b11
        ).astype(out_ref.dtype)


# ---------------------------------------------------------------------------
# Wrapper: BN folding, im2col slab, weight packing, pallas_call.
# ---------------------------------------------------------------------------
def fold_bn(w, b, gamma, beta, mean, var, eps=1e-5):
    """Fold eval-mode BatchNorm into the preceding conv (OIHW weights)."""
    scale = gamma / jnp.sqrt(var + eps)
    w_f = w * scale[:, None, None, None]
    b_f = (b - mean) * scale + beta
    return w_f, b_f


def _tensorcores_per_chip():
    """2 for v7x-class parts (2 TC/chip), else 1 (v5e/v6e)."""
    try:
        kind = jax.devices()[0].device_kind.lower()
    except Exception:
        return 1
    return 2 if "v7" in kind else 1


_MIN_LANES_PER_CORE = 2048          # don't split sub-us matmuls across cores
_VMEM_BLOCK_BUDGET = 8 * 1024 * 1024  # per-step slab+out block budget (bytes)


def dib_forward(x_nchw, params, *, eps=1e-5):
    N, Cin, H, W = x_nchw.shape
    Cout = params["w1"].shape[0]
    dils = (1, 2, 4)
    pad = max(dils)
    HW = H * W
    K = 3 * 9 * Cin

    # ---- generation-aware batch split: only shard across TensorCores when
    # the chip has 2 TCs (v7x) AND each core gets enough work to amortize the
    # per-step / cross-core overhead.  Otherwise fold the whole batch into one
    # grid step (bigger matmul M, no duplicated fixed cost on v5e/v6e).
    cores = _tensorcores_per_chip()
    want_split = cores > 1 and N > 1 and (N * HW) // cores >= _MIN_LANES_PER_CORE
    steps = cores if want_split else 1
    NB = -(-N // steps)                      # cdiv
    # Bound the per-step block by a VMEM budget (Pallas double-buffers it).
    per_sample_bytes = K * HW * 2 + Cout * HW * 4   # bf16 slab + f32 out
    NB = min(NB, max(1, _VMEM_BLOCK_BUDGET // per_sample_bytes))
    steps = -(-N // NB)
    Npad = steps * NB

    # ---- input glue: stay NCHW, cast to bf16 once, shared spatial zero-pad.
    x = x_nchw.astype(jnp.bfloat16)
    if Npad != N:
        x = jnp.pad(x, ((0, Npad - N), (0, 0), (0, 0), (0, 0)))
    x_pad = jnp.pad(x, ((0, 0), (0, 0), (pad, pad), (pad, pad)))

    # ---- im2col hoisted to the wrapper (XLA): slab rows ordered
    # (dilation, tap_i, tap_j, cin); lanes are (h, w) per sample.  No
    # transposes anywhere; the stack+reshape is a contiguous merge.
    pieces = []
    for d in dils:
        for i in range(3):
            for j in range(3):
                oh = pad + (i - 1) * d
                ow = pad + (j - 1) * d
                pieces.append(x_pad[:, :, oh:oh + H, ow:ow + W])  # (Npad,Cin,H,W)
    slab = jnp.stack(pieces, axis=1).reshape(Npad, K, HW)          # bf16

    # ---- fold BN and pack the three branches into one block-diagonal,
    # transposed weight [3*Cout, K] plus one bias column [3*Cout, 1].
    wcatT = jnp.zeros((3 * Cout, K), jnp.float32)
    b_list = []
    for idx, name in enumerate(("1", "2", "4")):
        w_f, b_f = fold_bn(params[f"w{name}"], params[f"b{name}"],
                           params[f"bn{name}_gamma"], params[f"bn{name}_beta"],
                           params[f"bn{name}_mean"], params[f"bn{name}_var"],
                           eps)
        # (Cout, Cin, 3, 3) -> columns ordered (i, j, cin), matching the slab.
        w_d = jnp.transpose(w_f, (0, 2, 3, 1)).reshape(Cout, 9 * Cin)
        wcatT = wcatT.at[idx * Cout:(idx + 1) * Cout,
                         idx * 9 * Cin:(idx + 1) * 9 * Cin].set(w_d)
        b_list.append(b_f)
    wcatT = wcatT.astype(jnp.bfloat16)
    bcat = jnp.concatenate(b_list).reshape(3 * Cout, 1).astype(jnp.float32)

    # 1x1 conv weights/bias (already in the transposed, lane-dense orientation).
    w11 = params["w11"].reshape(Cout, 3 * Cout).astype(jnp.bfloat16)
    b11 = params["b11"].reshape(Cout, 1).astype(jnp.float32)

    out = pl.pallas_call(
        dib_kernel,
        out_shape=jax.ShapeDtypeStruct((Npad, Cout, HW), jnp.float32),
        grid_spec=pltpu.PrefetchScalarGridSpec(
            num_scalar_prefetch=0,
            grid=(steps,),
            in_specs=[
                pl.BlockSpec((NB, K, HW), lambda g: (g, 0, 0)),        # slab
                pl.BlockSpec((3 * Cout, K), lambda g: (0, 0)),         # wcat^T
                pl.BlockSpec((3 * Cout, 1), lambda g: (0, 0)),         # bcat
                pl.BlockSpec((Cout, 3 * Cout), lambda g: (0, 0)),      # w11
                pl.BlockSpec((Cout, 1), lambda g: (0, 0)),             # b11
            ],
            out_specs=pl.BlockSpec((NB, Cout, HW), lambda g: (g, 0, 0)),
        ),
        compiler_params=pltpu.CompilerParams(
            dimension_semantics=("parallel",),
            vmem_limit_bytes=32 * 1024 * 1024),
    )(slab, wcatT, bcat, w11, b11)

    # (N, Cout, H*W) is already NCHW-ordered in memory: free metadata reshape.
    return out[:N].reshape(N, Cout, H, W)


# ---------------------------------------------------------------------------
# Pure-JAX reference (NCHW, lax convs, fp32) for verification.
# ---------------------------------------------------------------------------
def dib_reference(x, params, eps=1e-5):
    def branch(w, b, gamma, beta, mean, var, d):
        y = jax.lax.conv_general_dilated(
            x, w, window_strides=(1, 1), padding=[(d, d), (d, d)],
            rhs_dilation=(d, d), dimension_numbers=("NCHW", "OIHW", "NCHW"))
        y = y + b[None, :, None, None]
        y = (y - mean[None, :, None, None]) / jnp.sqrt(
            var[None, :, None, None] + eps)
        y = y * gamma[None, :, None, None] + beta[None, :, None, None]
        return jnp.maximum(y, 0.0)

    x1 = branch(params["w1"], params["b1"], params["bn1_gamma"],
                params["bn1_beta"], params["bn1_mean"], params["bn1_var"], 1)
    x2 = branch(params["w2"], params["b2"], params["bn2_gamma"],
                params["bn2_beta"], params["bn2_mean"], params["bn2_var"], 2)
    x3 = branch(params["w4"], params["b4"], params["bn4_gamma"],
                params["bn4_beta"], params["bn4_mean"], params["bn4_var"], 4)
    cat = jnp.concatenate([x1, x2, x3], axis=1)
    out = jax.lax.conv_general_dilated(
        cat, params["w11"], (1, 1), "VALID",
        dimension_numbers=("NCHW", "OIHW", "NCHW"))
    return out + params["b11"][None, :, None, None]


# ---------------------------------------------------------------------------
if __name__ == "__main__":
    # Small shapes consistent with the module: N=2, in_ch=4, out_ch=8, 16x16.
    N, Cin, Cout, H, W = 2, 4, 8, 16, 16
    key = jax.random.PRNGKey(0)
    ks = jax.random.split(key, 16)

    # Deterministic synthetic parameters (no checkpoint load).
    # NOTE: BatchNorm uses eval-mode semantics (running stats).
    # TODO(synk): training-mode BN (batch statistics + running-stat update)
    # is not reproduced.
    params = {
        "w1": 0.1 * jax.random.normal(ks[0], (Cout, Cin, 3, 3), jnp.float32),
        "b1": 0.1 * jax.random.normal(ks[1], (Cout,), jnp.float32),
        "w2": 0.1 * jax.random.normal(ks[2], (Cout, Cin, 3, 3), jnp.float32),
        "b2": 0.1 * jax.random.normal(ks[3], (Cout,), jnp.float32),
        "w4": 0.1 * jax.random.normal(ks[4], (Cout, Cin, 3, 3), jnp.float32),
        "b4": 0.1 * jax.random.normal(ks[5], (Cout,), jnp.float32),
        "w11": 0.1 * jax.random.normal(ks[6], (Cout, 3 * Cout, 1, 1),
                                       jnp.float32),
        "b11": 0.1 * jax.random.normal(ks[7], (Cout,), jnp.float32),
    }
    for name, k0 in (("1", 8), ("2", 10), ("4", 12)):
        params[f"bn{name}_gamma"] = 0.5 + jax.random.uniform(
            ks[k0], (Cout,), jnp.float32)
        params[f"bn{name}_beta"] = 0.1 * jax.random.normal(
            ks[k0 + 1], (Cout,), jnp.float32)
        params[f"bn{name}_mean"] = jnp.zeros((Cout,), jnp.float32)
        params[f"bn{name}_var"] = jnp.ones((Cout,), jnp.float32)

    x = jax.random.normal(ks[14], (N, Cin, H, W), jnp.float32)

    out = jax.jit(dib_forward)(x, params)
    out = jax.block_until_ready(out)

    ref = jax.block_until_ready(dib_reference(x, params))
    assert out.shape == (N, Cout, H, W)
    # Tolerance loosened vs the fp32 reference because matmul inputs are bf16
    # (MXU-native); accumulation is fp32.
    np.testing.assert_allclose(np.asarray(out), np.asarray(ref),
                               rtol=5e-2, atol=5e-2)
    print("KERNEL_OK")
</pallas_src>

<mosaic_0001>
module attributes {stable_mosaic.version = 11 : i64} {
  func.func @dib_kernel(%arg0: i32, %arg1: memref<2x108x256xbf16, #tpu.memory_space<vmem>>, %arg2: memref<24x108xbf16, #tpu.memory_space<vmem>>, %arg3: memref<24x1xf32, #tpu.memory_space<vmem>>, %arg4: memref<8x24xbf16, #tpu.memory_space<vmem>>, %arg5: memref<8x1xf32, #tpu.memory_space<vmem>>, %arg6: memref<2x8x256xf32, #tpu.memory_space<vmem>>) attributes {dimension_semantics = [#tpu.dimension_semantics<parallel>], iteration_bounds = array<i64: 1>, scalar_prefetch = 0 : i64, scratch_operands = 0 : i64, tpu.core_type = #tpu.core_type<tc>, window_params = [{transform_indices = @transform_0, window_bounds = array<i64: 2, 108, 256>}, {pipeline_mode = #tpu.pipeline_mode<synchronous>, transform_indices = @transform_1, window_bounds = array<i64: 24, 108>}, {pipeline_mode = #tpu.pipeline_mode<synchronous>, transform_indices = @transform_2, window_bounds = array<i64: 24, 1>}, {pipeline_mode = #tpu.pipeline_mode<synchronous>, transform_indices = @transform_3, window_bounds = array<i64: 8, 24>}, {pipeline_mode = #tpu.pipeline_mode<synchronous>, transform_indices = @transform_4, window_bounds = array<i64: 8, 1>}, {transform_indices = @transform_5, window_bounds = array<i64: 2, 8, 256>}]} {
    %c0 = arith.constant 0 : index
    %c0_0 = arith.constant 0 : index
    %0 = vector.load %arg2[%c0, %c0_0] : memref<24x108xbf16, #tpu.memory_space<vmem>>, vector<24x108xbf16>
    %c0_1 = arith.constant 0 : index
    %c0_2 = arith.constant 0 : index
    %1 = vector.load %arg3[%c0_1, %c0_2] : memref<24x1xf32, #tpu.memory_space<vmem>>, vector<24x1xf32>
    %c0_3 = arith.constant 0 : index
    %c0_4 = arith.constant 0 : index
    %2 = vector.load %arg4[%c0_3, %c0_4] : memref<8x24xbf16, #tpu.memory_space<vmem>>, vector<8x24xbf16>
    %c0_5 = arith.constant 0 : index
    %c0_6 = arith.constant 0 : index
    %3 = vector.load %arg5[%c0_5, %c0_6] : memref<8x1xf32, #tpu.memory_space<vmem>>, vector<8x1xf32>
    %c0_7 = arith.constant 0 : index
    %c0_8 = arith.constant 0 : index
    %c0_9 = arith.constant 0 : index
    %4 = vector.load %arg1[%c0_7, %c0_8, %c0_9] : memref<2x108x256xbf16, #tpu.memory_space<vmem>>, vector<1x108x256xbf16>
    %5 = vector.shape_cast %4 : vector<1x108x256xbf16> to vector<108x256xbf16>
    %cst = arith.constant dense<0.000000e+00> : vector<24x256xf32>
    %6 = tpu.matmul %0, %5, %cst {dimension_numbers = #tpu.dot_dimension_numbers<[1], [0], [0], [1], [0, 0, 1, 1], [], []>} : vector<24x108xbf16>, vector<108x256xbf16>, vector<24x256xf32> -> vector<24x256xf32>
    %7 = vector.broadcast %1 : vector<24x1xf32> to vector<24x256xf32>
    %8 = arith.addf %6, %7 : vector<24x256xf32>
    %cst_10 = arith.constant 0.000000e+00 : f32
    %9 = vector.broadcast %cst_10 : f32 to vector<24x256xf32>
    %10 = arith.maximumf %8, %9 : vector<24x256xf32>
    %11 = arith.truncf %10 : vector<24x256xf32> to vector<24x256xbf16>
    %cst_11 = arith.constant dense<0.000000e+00> : vector<8x256xf32>
    %12 = tpu.matmul %2, %11, %cst_11 {dimension_numbers = #tpu.dot_dimension_numbers<[1], [0], [0], [1], [0, 0, 1, 1], [], []>} : vector<8x24xbf16>, vector<24x256xbf16>, vector<8x256xf32> -> vector<8x256xf32>
    %13 = vector.broadcast %3 : vector<8x1xf32> to vector<8x256xf32>
    %14 = arith.addf %12, %13 : vector<8x256xf32>
    %c0_12 = arith.constant 0 : index
    %c0_13 = arith.constant 0 : index
    %c0_14 = arith.constant 0 : index
    %15 = vector.load %arg6[%c0_12, %c0_13, %c0_14] : memref<2x8x256xf32, #tpu.memory_space<vmem>>, vector<1x8x256xf32>
    %16 = vector.shape_cast %15 : vector<1x8x256xf32> to vector<8x256xf32>
    %17 = vector.shape_cast %14 : vector<8x256xf32> to vector<1x8x256xf32>
    tpu.vector_store %arg6[%c0_12, %c0_13, %c0_14], %17 {strides = array<i32>} : memref<2x8x256xf32, #tpu.memory_space<vmem>>, vector<1x8x256xf32>,
    %c1 = arith.constant 1 : index
    %c0_15 = arith.constant 0 : index
    %c0_16 = arith.constant 0 : index
    %18 = vector.load %arg1[%c1, %c0_15, %c0_16] : memref<2x108x256xbf16, #tpu.memory_space<vmem>>, vector<1x108x256xbf16>
    %19 = vector.shape_cast %18 : vector<1x108x256xbf16> to vector<108x256xbf16>
    %cst_17 = arith.constant dense<0.000000e+00> : vector<24x256xf32>
    %20 = tpu.matmul %0, %19, %cst_17 {dimension_numbers = #tpu.dot_dimension_numbers<[1], [0], [0], [1], [0, 0, 1, 1], [], []>} : vector<24x108xbf16>, vector<108x256xbf16>, vector<24x256xf32> -> vector<24x256xf32>
    %21 = vector.broadcast %1 : vector<24x1xf32> to vector<24x256xf32>
    %22 = arith.addf %20, %21 : vector<24x256xf32>
    %cst_18 = arith.constant 0.000000e+00 : f32
    %23 = vector.broadcast %cst_18 : f32 to vector<24x256xf32>
    %24 = arith.maximumf %22, %23 : vector<24x256xf32>
    %25 = arith.truncf %24 : vector<24x256xf32> to vector<24x256xbf16>
    %cst_19 = arith.constant dense<0.000000e+00> : vector<8x256xf32>
    %26 = tpu.matmul %2, %25, %cst_19 {dimension_numbers = #tpu.dot_dimension_numbers<[1], [0], [0], [1], [0, 0, 1, 1], [], []>} : vector<8x24xbf16>, vector<24x256xbf16>, vector<8x256xf32> -> vector<8x256xf32>
    %27 = vector.broadcast %3 : vector<8x1xf32> to vector<8x256xf32>
    %28 = arith.addf %26, %27 : vector<8x256xf32>
    %c1_20 = arith.constant 1 : index
    %c0_21 = arith.constant 0 : index
    %c0_22 = arith.constant 0 : index
    %29 = vector.load %arg6[%c1_20, %c0_21, %c0_22] : memref<2x8x256xf32, #tpu.memory_space<vmem>>, vector<1x8x256xf32>
    %30 = vector.shape_cast %29 : vector<1x8x256xf32> to vector<8x256xf32>
    %31 = vector.shape_cast %28 : vector<8x256xf32> to vector<1x8x256xf32>
    tpu.vector_store %arg6[%c1_20, %c0_21, %c0_22], %31 {strides = array<i32>} : memref<2x8x256xf32, #tpu.memory_space<vmem>>, vector<1x8x256xf32>,
    return
  }
  func.func @transform_0(%arg0: i32) -> (i32, i32, i32) {
    %c0_i32 = arith.constant 0 : i32
    %c0_i32_0 = arith.constant 0 : i32
    %c0_i32_1 = arith.constant 0 : i32
    return %arg0, %c0_i32, %c0_i32_0 : i32, i32, i32
  }
  func.func @transform_1(%arg0: i32) -> (i32, i32) {
    %c0_i32 = arith.constant 0 : i32
    %c0_i32_0 = arith.constant 0 : i32
    %c0_i32_1 = arith.constant 0 : i32
    return %c0_i32, %c0_i32_0 : i32, i32
  }
  func.func @transform_2(%arg0: i32) -> (i32, i32) {
    %c0_i32 = arith.constant 0 : i32
    %c0_i32_0 = arith.constant 0 : i32
    %c0_i32_1 = arith.constant 0 : i32
    return %c0_i32, %c0_i32_0 : i32, i32
  }
  func.func @transform_3(%arg0: i32) -> (i32, i32) {
    %c0_i32 = arith.constant 0 : i32
    %c0_i32_0 = arith.constant 0 : i32
    %c0_i32_1 = arith.constant 0 : i32
    return %c0_i32, %c0_i32_0 : i32, i32
  }
  func.func @transform_4(%arg0: i32) -> (i32, i32) {
    %c0_i32 = arith.constant 0 : i32
    %c0_i32_0 = arith.constant 0 : i32
    %c0_i32_1 = arith.constant 0 : i32
    return %c0_i32, %c0_i32_0 : i32, i32
  }
  func.func @transform_5(%arg0: i32) -> (i32, i32, i32) {
    %c0_i32 = arith.constant 0 : i32
    %c0_i32_0 = arith.constant 0 : i32
    %c0_i32_1 = arith.constant 0 : i32
    return %arg0, %c0_i32, %c0_i32_0 : i32, i32, i32
  }
}

</mosaic_0001>

<llo_original>
// kernel: dib_forward.1
$region0: #{dib_forward.1}
  #allocation0 [shape = 'u32[]', space=smem, size = 0x4, offset = 0x4, fixed_abs, tag = 'smem constant byte address 0x4 - core index']
  #allocation1 [shape = 'u32[144,128]{1,0:T(1,128)}', space=vmem, size = 0x12000, scoped, tag = 'internal scratch']
  %s0 = inlined_call_operand.vmem [shape: bf16[2,108,256], index: 0, kind: input, shape index: {}]
  %s1 = inlined_call_operand.vmem [shape: bf16[24,108], index: 1, kind: input, shape index: {}]
  %s2 = inlined_call_operand.vmem [shape: f32[24,1], index: 2, kind: input, shape index: {}]
  %s3 = inlined_call_operand.vmem [shape: bf16[8,24], index: 3, kind: input, shape index: {}]
  %s4 = inlined_call_operand.vmem [shape: f32[8,1], index: 4, kind: input, shape index: {}]
  %s5 = inlined_call_operand.vmem [shape: f32[2,8,256], index: 5, kind: output, shape index: {}]
  %s6 = sld [smem:[#allocation0]]
  $region30: #{dib_forward.1} parent=0
    _
  %s8 = ssub.s32 1, %s6
  %s9 = scalar_select 0, %s8, %s6
  // Predicated region
  $region2: #{dib_forward.1} parent=0 // pred_check
    _
  $region3: #{dib_forward.1} parent=0 // pred_check_branch
    %11 = sbr.rel (0) target = $region5
  $region4: #{dib_forward.1} parent=0 // pred_region
    _
  $region5: #{dib_forward.1} parent=0 // pred_fallthru
    _
  // Predicated region
  $region6: #{dib_forward.1} parent=0 // pred_check
    _
  $region7: #{dib_forward.1} parent=0 // pred_check_branch
    %13 = sbr.rel (0) target = $region9
  $region8: #{dib_forward.1} parent=0 // pred_region
    _
  $region9: #{dib_forward.1} parent=0 // pred_fallthru
    _
  // Predicated region
  $region10: #{dib_forward.1} parent=0 // pred_check
    _
  $region11: #{dib_forward.1} parent=0 // pred_check_branch
    %15 = sbr.rel (0) target = $region13
  $region12: #{dib_forward.1} parent=0 // pred_region
    _
  $region13: #{dib_forward.1} parent=0 // pred_fallthru
    _
  // Predicated region
  $region14: #{dib_forward.1} parent=0 // pred_check
    _
  $region15: #{dib_forward.1} parent=0 // pred_check_branch
    %17 = sbr.rel (0) target = $region17
  $region16: #{dib_forward.1} parent=0 // pred_region
    _
  $region17: #{dib_forward.1} parent=0 // pred_fallthru
    _
  // Predicated region
  $region18: #{dib_forward.1} parent=0 // pred_check
    _
  $region19: #{dib_forward.1} parent=0 // pred_check_branch
    %19 = sbr.rel (0) target = $region21
  $region20: #{dib_forward.1} parent=0 // pred_region
    _
  $region21: #{dib_forward.1} parent=0 // pred_fallthru
    _
  %v21 = vld [vmem:[%s1] sm:$0xf]
  %v22 = vld [vmem:[%s1 + $0x4] sm:$0xf]
  %v23 = vld [vmem:[%s1 + $0x8] sm:$0xf]
  %v24 = vld [vmem:[%s2] sm:$0xff]
  %v25 = vld [vmem:[%s2 + $0x8] sm:$0xff]
  %v26 = vld [vmem:[%s2 + $0x10] sm:$0xff]
  %v27 = vld [vmem:[%s3] sm:$0xf]
  %v28 = vld [vmem:[%s4] sm:$0xff]
  %v29 = vld [vmem:[%s0] sm:$0xff]
  %v30 = vld [vmem:[%s0 + $0x8] sm:$0xff]
  %v31 = vld [vmem:[%s0 + $0x10] sm:$0xff]
  %v32 = vld [vmem:[%s0 + $0x18] sm:$0xff]
  %v33 = vld [vmem:[%s0 + $0x20] sm:$0xff]
  %v34 = vld [vmem:[%s0 + $0x28] sm:$0xff]
  %v35 = vld [vmem:[%s0 + $0x30] sm:$0xff]
  %v36 = vld [vmem:[%s0 + $0x38] sm:$0xff]
  %v37 = vld [vmem:[%s0 + $0x40] sm:$0xff]
  %v38 = vld [vmem:[%s0 + $0x48] sm:$0xff]
  %v39 = vld [vmem:[%s0 + $0x50] sm:$0xff]
  %v40 = vld [vmem:[%s0 + $0x58] sm:$0xff]
  %v41 = vld [vmem:[%s0 + $0x60] sm:$0xff]
  %v42 = vld [vmem:[%s0 + $0x68] sm:$0x33]
  %44 = vset.pattern.permute.xlu0 0
  %45 = vperm.xlu0 %44, %v24
  %v46 = vpop.permute.xlu0 %45
  %49 = vset.pattern.permute.xlu0 0
  %50 = vperm.xlu0 %49, %v25
  %v51 = vpop.permute.xlu0 %50
  %54 = vset.pattern.permute.xlu0 0
  %55 = vperm.xlu0 %54, %v26
  %v56 = vpop.permute.xlu0 %55
  %v61 = vunpack.c.l.b16 %v21
  %v62 = vunpack.c.l.b16 %v22
  %v63 = vunpack.c.l.b16 %v23
  %v64 = vpack.c.b16 %v62, %v61
  %v65 = vpack.c.b16 %v63, %v63
  %v80 = vunpack.c.l.b16 %v29
  %v81 = vunpack.c.h.b16 %v29
  %v82 = vunpack.c.l.b16 %v30
  %v83 = vunpack.c.h.b16 %v30
  %v84 = vunpack.c.l.b16 %v31
  %v85 = vunpack.c.h.b16 %v31
  %v86 = vunpack.c.l.b16 %v32
  %v87 = vunpack.c.h.b16 %v32
  %v88 = vunpack.c.l.b16 %v33
  %v89 = vunpack.c.h.b16 %v33
  %v90 = vunpack.c.l.b16 %v34
  %v91 = vunpack.c.h.b16 %v34
  %v92 = vunpack.c.l.b16 %v35
  %v93 = vunpack.c.h.b16 %v35
  %v94 = vunpack.c.l.b16 %v36
  %v95 = vunpack.c.h.b16 %v36
  %v96 = vunpack.c.l.b16 %v37
  %v97 = vunpack.c.h.b16 %v37
  %v98 = vunpack.c.l.b16 %v38
  %v99 = vunpack.c.h.b16 %v38
  %v100 = vunpack.c.l.b16 %v39
  %v101 = vunpack.c.h.b16 %v39
  %v102 = vunpack.c.l.b16 %v40
  %v103 = vunpack.c.h.b16 %v40
  %v104 = vunpack.c.l.b16 %v41
  %v105 = vunpack.c.h.b16 %v41
  %v106 = vunpack.c.l.b16 %v42
  %v107 = vunpack.c.h.b16 %v42
  %v108 = vpack.c.b16 %v82, %v80
  %v109 = vpack.c.b16 %v83, %v81
  %v110 = vpack.c.b16 %v86, %v84
  %v111 = vpack.c.b16 %v87, %v85
  %v112 = vpack.c.b16 %v90, %v88
  %v113 = vpack.c.b16 %v91, %v89
  %v114 = vpack.c.b16 %v94, %v92
  %v115 = vpack.c.b16 %v95, %v93
  %v116 = vpack.c.b16 %v98, %v96
  %v117 = vpack.c.b16 %v99, %v97
  %v118 = vpack.c.b16 %v102, %v100
  %v119 = vpack.c.b16 %v103, %v101
  %v120 = vpack.c.b16 %v106, %v104
  %v121 = vpack.c.b16 %v107, %v105
  %vm134 = vcmask 883712
  %v136 = vsel %vm134, %v64, 0
  %v139 = vsel %vm134, %v65, 0
  %vm141 = vcmask 1045504
  %v143 = vsel %vm141, %v120, 0
  %v146 = vsel %vm141, %v121, 0
  %148 = vmatprep.subr.bf16.mxu0 %v109
  %149 = vmatpush1.bf16.msra.mxu0 %v108
  %150 = vmatprep.subr.bf16.mxu0 %v111
  %151 = vmatpush1.bf16.msra.mxu0 %v110
  %152 = vmatprep.subr.bf16.mxu0 %v113
  %153 = vmatpush1.bf16.msra.mxu0 %v112
  %154 = vmatprep.subr.bf16.mxu0 %v115
  %155 = vmatpush1.bf16.msra.mxu0 %v114
  %156 = vmatprep.subr.bf16.mxu0 %v117
  %157 = vmatpush1.bf16.msra.mxu0 %v116
  %158 = vmatprep.subr.bf16.mxu0 %v119
  %159 = vmatpush1.bf16.msra.mxu0 %v118
  %160 = vmatprep.subr.bf16.mxu0 %v146
  %161 = vmatpush1.bf16.msra.mxu0 %v143
  %162 = vmatprep.subr.bf16.mxu0 0
  %163 = vmatpush1.bf16.msra.mxu0 0
  %164 = vmatprep.subr.bf16.mxu0 0
  %165 = vmatpush1.bf16.msra.mxu0 0
  %166 = vmatprep.subr.bf16.mxu0 0
  %167 = vmatpush1.bf16.msra.mxu0 0
  %168 = vmatprep.subr.bf16.mxu0 0
  %169 = vmatpush1.bf16.msra.mxu0 0
  %170 = vmatprep.subr.bf16.mxu0 0
  %171 = vmatpush1.bf16.msra.mxu0 0
  %172 = vmatprep.subr.bf16.mxu0 0
  %173 = vmatpush1.bf16.msra.mxu0 0
  %174 = vmatprep.subr.bf16.mxu0 0
  %175 = vmatpush1.bf16.msra.mxu0 0
  %176 = vmatprep.subr.bf16.mxu0 0
  %177 = vmatpush1.bf16.msra.mxu0 0
  %178 = vmatprep.subr.bf16.mxu0 0
  %179 = vmatpush1.bf16.msra.mxu0 0
  %180 = vmatprep.mubr.bf16.mxu0 0
  %181 = vmatmul.mubr.bf16.gmra.mrb[0].mxu0 %v136
  %v182 = vpop.f32.mrb[0].mxu0
  %v183 = vadd.f32 %v46, %v182
  %v184 = vpop.f32.mrb[0].mxu0
  %v185 = vadd.f32 %v46, %v184
  %v186 = vpop.f32.mrb[0].mxu0
  %v187 = vadd.f32 %v51, %v186
  %v188 = vpop.f32.mrb[0].mxu0
  %v189 = vadd.f32 %v51, %v188
  %190 = vmatprep.mubr.bf16.mxu0 0
  %191 = vmatmul.mubr.bf16.gmra.mrb[0].mxu0 %v139
  %v192 = vpop.f32.mrb[0].mxu0
  %v193 = vadd.f32 %v56, %v192
  %v194 = vpop.f32.mrb[0].mxu0
  %v195 = vadd.f32 %v56, %v194
  %v196 = vpop.f32.mrb[0].mxu0
  %v197 = vpop.f32.mrb[0].mxu0
  %198 = vdwg.mxu0
  %v199 = vmax.f32 %v183, 0.0
  %v200 = vmax.f32 %v185, 0.0
  %v201 = vmax.f32 %v187, 0.0
  %v202 = vmax.f32 %v189, 0.0
  %v203 = vmax.f32 %v193, 0.0
  %v204 = vmax.f32 %v195, 0.0
  %v205 = vpack.c.bf16 %v201, %v199
  %v206 = vpack.c.bf16 %v202, %v200
  %v207 = vpack.c.bf16 %v203, %v203
  %v208 = vpack.c.bf16 %v204, %v204
  %210 = vset.pattern.permute.xlu0 0
  %211 = vperm.xlu0 %210, %v28
  %v212 = vpop.permute.xlu0 %211
  %vm214 = vcmask 195584
  %v216 = vsel %vm214, %v27, 0
  %vm218 = vcmask 1043456
  %v220 = vsel %vm218, %v207, 0
  %v223 = vsel %vm218, %v208, 0
  %225 = vmatprep.subr.bf16.mxu0 %v206
  %226 = vmatpush1.bf16.msra.mxu0 %v205
  %227 = vmatprep.subr.bf16.mxu0 %v223
  %228 = vmatpush1.bf16.msra.mxu0 %v220
  %229 = vmatprep.subr.bf16.mxu0 0
  %230 = vmatpush1.bf16.msra.mxu0 0
  %231 = vmatprep.subr.bf16.mxu0 0
  %232 = vmatpush1.bf16.msra.mxu0 0
  %233 = vmatprep.subr.bf16.mxu0 0
  %234 = vmatpush1.bf16.msra.mxu0 0
  %235 = vmatprep.subr.bf16.mxu0 0
  %236 = vmatpush1.bf16.msra.mxu0 0
  %237 = vmatprep.subr.bf16.mxu0 0
  %238 = vmatpush1.bf16.msra.mxu0 0
  %239 = vmatprep.subr.bf16.mxu0 0
  %240 = vmatpush1.bf16.msra.mxu0 0
  %241 = vmatprep.subr.bf16.mxu0 0
  %242 = vmatpush1.bf16.msra.mxu0 0
  %243 = vmatprep.subr.bf16.mxu0 0
  %244 = vmatpush1.bf16.msra.mxu0 0
  %245 = vmatprep.subr.bf16.mxu0 0
  %246 = vmatpush1.bf16.msra.mxu0 0
  %247 = vmatprep.subr.bf16.mxu0 0
  %248 = vmatpush1.bf16.msra.mxu0 0
  %249 = vmatprep.subr.bf16.mxu0 0
  %250 = vmatpush1.bf16.msra.mxu0 0
  %251 = vmatprep.subr.bf16.mxu0 0
  %252 = vmatpush1.bf16.msra.mxu0 0
  %253 = vmatprep.subr.bf16.mxu0 0
  %254 = vmatpush1.bf16.msra.mxu0 0
  %255 = vmatprep.subr.bf16.mxu0 0
  %256 = vmatpush1.bf16.msra.mxu0 0
  %257 = vmatprep.mubr.bf16.mxu0 0
  %258 = vmatmul.mubr.bf16.gmra.mrb[0].mxu0 %v216
  %v259 = vpop.f32.mrb[0].mxu0
  %v260 = vadd.f32 %v212, %v259
  %v261 = vpop.f32.mrb[0].mxu0
  %v262 = vadd.f32 %v212, %v261
  %v263 = vpop.f32.mrb[0].mxu0
  %v264 = vpop.f32.mrb[0].mxu0
  %265 = vdwg.mxu0
  %266 = vst [vmem:[%s5] sm:$0xff] %v260
  %267 = vst [vmem:[%s5 + $0x8] sm:$0xff] %v262
  %s268 = scalar_lea.vmem %s0, 112
  %v269 = vld [vmem:[%s268] sm:$0xff]
  %v270 = vld [vmem:[%s268 + $0x8] sm:$0xff]
  %v271 = vld [vmem:[%s268 + $0x10] sm:$0xff]
  %v272 = vld [vmem:[%s268 + $0x18] sm:$0xff]
  %v273 = vld [vmem:[%s268 + $0x20] sm:$0xff]
  %v274 = vld [vmem:[%s268 + $0x28] sm:$0xff]
  %v275 = vld [vmem:[%s268 + $0x30] sm:$0xff]
  %v276 = vld [vmem:[%s268 + $0x38] sm:$0xff]
  %v277 = vld [vmem:[%s268 + $0x40] sm:$0xff]
  %v278 = vld [vmem:[%s268 + $0x48] sm:$0xff]
  %v279 = vld [vmem:[%s268 + $0x50] sm:$0xff]
  %v280 = vld [vmem:[%s268 + $0x58] sm:$0xff]
  %v281 = vld [vmem:[%s268 + $0x60] sm:$0xff]
  %v282 = vld [vmem:[%s268 + $0x68] sm:$0x33]
  %v297 = vunpack.c.l.b16 %v269
  %v298 = vunpack.c.h.b16 %v269
  %v299 = vunpack.c.l.b16 %v270
  %v300 = vunpack.c.h.b16 %v270
  %v301 = vunpack.c.l.b16 %v271
  %v302 = vunpack.c.h.b16 %v271
  %v303 = vunpack.c.l.b16 %v272
  %v304 = vunpack.c.h.b16 %v272
  %v305 = vunpack.c.l.b16 %v273
  %v306 = vunpack.c.h.b16 %v273
  %v307 = vunpack.c.l.b16 %v274
  %v308 = vunpack.c.h.b16 %v274
  %v309 = vunpack.c.l.b16 %v275
  %v310 = vunpack.c.h.b16 %v275
  %v311 = vunpack.c.l.b16 %v276
  %v312 = vunpack.c.h.b16 %v276
  %v313 = vunpack.c.l.b16 %v277
  %v314 = vunpack.c.h.b16 %v277
  %v315 = vunpack.c.l.b16 %v278
  %v316 = vunpack.c.h.b16 %v278
  %v317 = vunpack.c.l.b16 %v279
  %v318 = vunpack.c.h.b16 %v279
  %v319 = vunpack.c.l.b16 %v280
  %v320 = vunpack.c.h.b16 %v280
  %v321 = vunpack.c.l.b16 %v281
  %v322 = vunpack.c.h.b16 %v281
  %v323 = vunpack.c.l.b16 %v282
  %v324 = vunpack.c.h.b16 %v282
  %v325 = vpack.c.b16 %v299, %v297
  %v326 = vpack.c.b16 %v300, %v298
  %v327 = vpack.c.b16 %v303, %v301
  %v328 = vpack.c.b16 %v304, %v302
  %v329 = vpack.c.b16 %v307, %v305
  %v330 = vpack.c.b16 %v308, %v306
  %v331 = vpack.c.b16 %v311, %v309
  %v332 = vpack.c.b16 %v312, %v310
  %v333 = vpack.c.b16 %v315, %v313
  %v334 = vpack.c.b16 %v316, %v314
  %v335 = vpack.c.b16 %v319, %v317
  %v336 = vpack.c.b16 %v320, %v318
  %v337 = vpack.c.b16 %v323, %v321
  %v338 = vpack.c.b16 %v324, %v322
  %v352 = vsel %vm141, %v337, 0
  %v355 = vsel %vm141, %v338, 0
  %357 = vmatprep.subr.bf16.mxu0 %v326
  %358 = vmatpush1.bf16.msra.mxu0 %v325
  %359 = vmatprep.subr.bf16.mxu0 %v328
  %360 = vmatpush1.bf16.msra.mxu0 %v327
  %361 = vmatprep.subr.bf16.mxu0 %v330
  %362 = vmatpush1.bf16.msra.mxu0 %v329
  %363 = vmatprep.subr.bf16.mxu0 %v332
  %364 = vmatpush1.bf16.msra.mxu0 %v331
  %365 = vmatprep.subr.bf16.mxu0 %v334
  %366 = vmatpush1.bf16.msra.mxu0 %v333
  %367 = vmatprep.subr.bf16.mxu0 %v336
  %368 = vmatpush1.bf16.msra.mxu0 %v335
  %369 = vmatprep.subr.bf16.mxu0 %v355
  %370 = vmatpush1.bf16.msra.mxu0 %v352
  %371 = vmatprep.subr.bf16.mxu0 0
  %372 = vmatpush1.bf16.msra.mxu0 0
  %373 = vmatprep.subr.bf16.mxu0 0
  %374 = vmatpush1.bf16.msra.mxu0 0
  %375 = vmatprep.subr.bf16.mxu0 0
  %376 = vmatpush1.bf16.msra.mxu0 0
  %377 = vmatprep.subr.bf16.mxu0 0
  %378 = vmatpush1.bf16.msra.mxu0 0
  %379 = vmatprep.subr.bf16.mxu0 0
  %380 = vmatpush1.bf16.msra.mxu0 0
  %381 = vmatprep.subr.bf16.mxu0 0
  %382 = vmatpush1.bf16.msra.mxu0 0
  %383 = vmatprep.subr.bf16.mxu0 0
  %384 = vmatpush1.bf16.msra.mxu0 0
  %385 = vmatprep.subr.bf16.mxu0 0
  %386 = vmatpush1.bf16.msra.mxu0 0
  %387 = vmatprep.subr.bf16.mxu0 0
  %388 = vmatpush1.bf16.msra.mxu0 0
  %389 = vmatprep.mubr.bf16.mxu0 0
  %390 = vmatmul.mubr.bf16.gmra.mrb[0].mxu0 %v136
  %v391 = vpop.f32.mrb[0].mxu0
  %v392 = vadd.f32 %v46, %v391
  %v393 = vpop.f32.mrb[0].mxu0
  %v394 = vadd.f32 %v46, %v393
  %v395 = vpop.f32.mrb[0].mxu0
  %v396 = vadd.f32 %v51, %v395
  %v397 = vpop.f32.mrb[0].mxu0
  %v398 = vadd.f32 %v51, %v397
  %399 = vmatprep.mubr.bf16.mxu0 0
  %400 = vmatmul.mubr.bf16.gmra.mrb[0].mxu0 %v139
  %v401 = vpop.f32.mrb[0].mxu0
  %v402 = vadd.f32 %v56, %v401
  %v403 = vpop.f32.mrb[0].mxu0
  %v404 = vadd.f32 %v56, %v403
  %v405 = vpop.f32.mrb[0].mxu0
  %v406 = vpop.f32.mrb[0].mxu0
  %407 = vdwg.mxu0
  %v408 = vmax.f32 %v392, 0.0
  %v409 = vmax.f32 %v394, 0.0
  %v410 = vmax.f32 %v396, 0.0
  %v411 = vmax.f32 %v398, 0.0
  %v412 = vmax.f32 %v402, 0.0
  %v413 = vmax.f32 %v404, 0.0
  %v414 = vpack.c.bf16 %v410, %v408
  %v415 = vpack.c.bf16 %v411, %v409
  %v416 = vpack.c.bf16 %v412, %v412
  %v417 = vpack.c.bf16 %v413, %v413
  %v419 = vsel %vm218, %v416, 0
  %v422 = vsel %vm218, %v417, 0
  %424 = vmatprep.subr.bf16.mxu0 %v415
  %425 = vmatpush1.bf16.msra.mxu0 %v414
  %426 = vmatprep.subr.bf16.mxu0 %v422
  %427 = vmatpush1.bf16.msra.mxu0 %v419
  %428 = vmatprep.subr.bf16.mxu0 0
  %429 = vmatpush1.bf16.msra.mxu0 0
  %430 = vmatprep.subr.bf16.mxu0 0
  %431 = vmatpush1.bf16.msra.mxu0 0
  %432 = vmatprep.subr.bf16.mxu0 0
  %433 = vmatpush1.bf16.msra.mxu0 0
  %434 = vmatprep.subr.bf16.mxu0 0
  %435 = vmatpush1.bf16.msra.mxu0 0
  %436 = vmatprep.subr.bf16.mxu0 0
  %437 = vmatpush1.bf16.msra.mxu0 0
  %438 = vmatprep.subr.bf16.mxu0 0
  %439 = vmatpush1.bf16.msra.mxu0 0
  %440 = vmatprep.subr.bf16.mxu0 0
  %441 = vmatpush1.bf16.msra.mxu0 0
  %442 = vmatprep.subr.bf16.mxu0 0
  %443 = vmatpush1.bf16.msra.mxu0 0
  %444 = vmatprep.subr.bf16.mxu0 0
  %445 = vmatpush1.bf16.msra.mxu0 0
  %446 = vmatprep.subr.bf16.mxu0 0
  %447 = vmatpush1.bf16.msra.mxu0 0
  %448 = vmatprep.subr.bf16.mxu0 0
  %449 = vmatpush1.bf16.msra.mxu0 0
  %450 = vmatprep.subr.bf16.mxu0 0
  %451 = vmatpush1.bf16.msra.mxu0 0
  %452 = vmatprep.subr.bf16.mxu0 0
  %453 = vmatpush1.bf16.msra.mxu0 0
  %454 = vmatprep.subr.bf16.mxu0 0
  %455 = vmatpush1.bf16.msra.mxu0 0
  %456 = vmatprep.mubr.bf16.mxu0 0
  %457 = vmatmul.mubr.bf16.gmra.mrb[0].mxu0 %v216
  %v458 = vpop.f32.mrb[0].mxu0
  %v459 = vadd.f32 %v212, %v458
  %v460 = vpop.f32.mrb[0].mxu0
  %v461 = vadd.f32 %v212, %v460
  %v462 = vpop.f32.mrb[0].mxu0
  %v463 = vpop.f32.mrb[0].mxu0
  %464 = vdwg.mxu0
  %s465 = scalar_lea.vmem %s5, 16
  %466 = vst [vmem:[%s465] sm:$0xff] %v459
  %467 = vst [vmem:[%s465 + $0x8] sm:$0xff] %v461
  // Predicated region
  $region22: #{dib_forward.1} parent=0 // pred_check
    _
  $region23: #{dib_forward.1} parent=0 // pred_check_branch
    %469 = sbr.rel (0) target = $region25
  $region24: #{dib_forward.1} parent=0 // pred_region
    _
  $region25: #{dib_forward.1} parent=0 // pred_fallthru
    _
  // Predicated region
  $region26: #{dib_forward.1} parent=0 // pred_check
    _
  $region27: #{dib_forward.1} parent=0 // pred_check_branch
    %471 = sbr.rel (0) target = $region29
  $region28: #{dib_forward.1} parent=0 // pred_region
    _
  $region29: #{dib_forward.1} parent=0 // pred_fallthru
    _

</llo_original>
